<compile_context>
chip_gen: v7x
topology: tpu7x:2x2x1
jax: 0.10.0
libtpu: 0.0.40
codegen_flags: <defaults>
</compile_context>

<pallas_src>
import functools

import jax
import jax.numpy as jnp
from jax.experimental import pallas as pl
from jax.experimental.pallas import tpu as pltpu

_LANE = 128  # pad the 2-wide FC output up to one full lane tile


def _vmem_spec():
    return pl.BlockSpec(memory_space=pltpu.MemorySpace.VMEM)


# ---------------------------------------------------------------------------
# Fused kernel (normalization=True):
#   (n, T*c) @ (T*c, c) + bias -> LayerNorm([n, c]) -> (n, c) @ (c, 128)
#   + bias -> sigmoid -> lane-dense (n, 128) store.
# ---------------------------------------------------------------------------
def _output_layer_norm_kernel(xt_ref, wt_ref, bt_ref, g_ref, bln_ref,
                              wf_ref, bf_ref, o_ref):
    # Temporal (T,1) conv as ONE MXU matmul (bf16 operands, f32 accumulation).
    y = jnp.dot(xt_ref[...], wt_ref[...],
                preferred_element_type=jnp.float32) + bt_ref[...]

    # nn.LayerNorm([n, c]): one mean/var over all n*c elements (biased var,
    # eps=1e-5).  One-pass stats: both full reductions issue independently.
    inv_count = 1.0 / float(y.shape[0] * y.shape[1])
    s = jnp.sum(y, keepdims=True)            # (1, 1)
    ss = jnp.sum(y * y, keepdims=True)       # (1, 1)
    mean = s * inv_count
    var = ss * inv_count - mean * mean
    scale = jax.lax.rsqrt(var + 1e-5)
    shift = -mean * scale
    y = (y * scale + shift) * g_ref[...] + bln_ref[...]

    # 1x1 conv (c -> 2) against a zero-padded (c, 128) bf16 weight: the store
    # is a full unmasked lane tile; host keeps only the first two columns.
    z = jnp.dot(y.astype(wf_ref.dtype), wf_ref[...],
                preferred_element_type=jnp.float32) + bf_ref[...]
    # sigmoid(z) = 0.5*(tanh(z/2) + 1): single EUP op, no VALU divide.
    o_ref[...] = 0.5 * (jnp.tanh(0.5 * z) + 1.0)


# ---------------------------------------------------------------------------
# Fused kernel (normalization=False): both convs folded offline into a single
# (T*c, 128) weight -> one matmul + bias + sigmoid.
# ---------------------------------------------------------------------------
def _output_layer_fold_kernel(xt_ref, w_ref, b_ref, o_ref):
    z = jnp.dot(xt_ref[...], w_ref[...],
                preferred_element_type=jnp.float32) + b_ref[...]
    o_ref[...] = 0.5 * (jnp.tanh(0.5 * z) + 1.0)


@functools.partial(jax.jit, static_argnames=("normalization",))
def output_layer_forward(x, prepared, *, normalization=True):
    """x: (T, n, c) float32 activations.  Returns (n, 2) sigmoid outputs."""
    t_f, n, c = x.shape
    # Lane-dense activation slab: (T, n, c) -> (n, T*c).  Built outside the
    # kernel so no concat/vreg-copy chain precedes the first MXU push; cast to
    # bf16 so both matmul operands are bf16 (accumulation stays f32).
    xt = jnp.transpose(x, (1, 0, 2)).reshape(n, t_f * c).astype(jnp.bfloat16)

    if normalization:
        args = (xt, prepared["wt_flat"], prepared["bt"], prepared["gamma"],
                prepared["beta"], prepared["wf_pad"], prepared["bf_pad"])
        kernel = _output_layer_norm_kernel
        flops = 2 * n * (t_f * c) * c + 2 * n * c * _LANE + 6 * n * c
    else:
        args = (xt, prepared["wt_fc"], prepared["b_fc"])
        kernel = _output_layer_fold_kernel
        flops = 2 * n * (t_f * c) * _LANE

    bytes_accessed = (sum(int(a.size) * a.dtype.itemsize for a in args)
                      + n * _LANE * 4)
    # VMEM residency guard: v7x has 64 MiB physical (32 MiB default scoped);
    # introduce a K-grid accumulator before approaching that at larger c/T.
    assert bytes_accessed < 24 * 1024 * 1024, bytes_accessed

    out_pad = pl.pallas_call(
        kernel,
        out_shape=jax.ShapeDtypeStruct((n, _LANE), jnp.float32),
        in_specs=[_vmem_spec()] * len(args),
        out_specs=_vmem_spec(),
        cost_estimate=pl.CostEstimate(flops=flops,
                                      transcendentals=n * _LANE,
                                      bytes_accessed=bytes_accessed),
        compiler_params=pltpu.CompilerParams(
            vmem_limit_bytes=32 * 1024 * 1024),
    )(*args)
    return out_pad[:, :2]


# ---------------------------------------------------------------------------
# One-time parameter re-layout (hoisted out of the per-forward path).
# ---------------------------------------------------------------------------
def prepare_output_layer_params(raw, c, t_f, n):
    # Conv2d(c, c, (T,1)) weight (c_out, c_in, T, 1) -> flattened (T*c_in,
    # c_out): row index t*c_in + ci matches the (n, T, c)->(n, T*c) reshape.
    wt_flat = jnp.transpose(raw["tconv_w"][:, :, :, 0], (2, 1, 0)).reshape(
        t_f * c, c)
    bt = raw["tconv_b"].reshape(1, c)
    # Conv2d(c, 2, 1) weight (2, c, 1, 1) -> (c, 2), zero-padded to (c, 128).
    wf = jnp.transpose(raw["fc_w"][:, :, 0, 0])
    wf_pad = jnp.zeros((c, _LANE), jnp.float32).at[:, :2].set(wf)
    bf_pad = jnp.zeros((1, _LANE), jnp.float32).at[0, :2].set(raw["fc_b"])
    # normalization=False fast path: fold both convs into one matmul (exact
    # f32 fold done once here).
    wt_fc = wt_flat @ wf_pad                      # (T*c, 128)
    b_fc = bt @ wf_pad + bf_pad                   # (1, 128)
    return dict(
        # bf16 MXU operands (f32 accumulation in-kernel); biases / LayerNorm
        # affine stay f32 (v5e has no native bf16 elementwise path).
        wt_flat=wt_flat.astype(jnp.bfloat16),
        bt=bt,
        gamma=raw["gamma"],
        beta=raw["beta"],
        wf_pad=wf_pad.astype(jnp.bfloat16),
        bf_pad=bf_pad,
        wt_fc=wt_fc.astype(jnp.bfloat16),
        b_fc=b_fc,
    )


def init_output_layer_params(key, c, t_f, n):
    ks = iter(jax.random.split(key, 8))

    def nrm(shape, scale=0.1):
        return scale * jax.random.normal(next(ks), shape, jnp.float32)

    return dict(
        tconv_w=nrm((c, c, t_f, 1)),        # torch Conv2d(c, c, (T, 1)) layout
        tconv_b=nrm((c,)),
        gamma=1.0 + nrm((n, c)),            # LayerNorm([n, c]) affine
        beta=nrm((n, c)),
        fc_w=nrm((2, c, 1, 1)),             # torch Conv2d(c, 2, 1) layout
        fc_b=nrm((2,)),
    )


# ---------------------------------------------------------------------------
# Pure-JAX reference (mirrors the PyTorch math) for a correctness check.
# ---------------------------------------------------------------------------
def output_layer_ref(x, raw, *, normalization=True):
    hp = jax.lax.Precision.HIGHEST
    y = jnp.einsum("tni,oit->no", x, raw["tconv_w"][:, :, :, 0],
                   precision=hp) + raw["tconv_b"]
    if normalization:
        mean = jnp.mean(y)
        var = jnp.mean((y - mean) ** 2)
        y = (y - mean) * jax.lax.rsqrt(var + 1e-5) * raw["gamma"] + raw["beta"]
    z = jnp.dot(y, jnp.transpose(raw["fc_w"][:, :, 0, 0]),
                precision=hp) + raw["fc_b"]
    return jax.nn.sigmoid(z)


if __name__ == "__main__":
    key = jax.random.PRNGKey(0)
    k_x, k_p = jax.random.split(key)

    num_nodes = 16     # n: graph nodes -> sublanes
    channels = 128     # c: hidden channels -> one full lane tile
    t_f = 8            # temporal extent collapsed by the (T, 1) conv

    x = jax.random.normal(k_x, (t_f, num_nodes, channels), jnp.float32)
    raw = init_output_layer_params(k_p, channels, t_f, num_nodes)
    prepared = prepare_output_layer_params(raw, channels, t_f, num_nodes)

    # --- normalization=True path --------------------------------------------
    out = output_layer_forward(x, prepared, normalization=True)
    out = jax.block_until_ready(out)

    assert out.shape == (num_nodes, 2), out.shape
    assert bool(jnp.all(jnp.isfinite(out)))
    assert bool(jnp.all((out >= 0.0) & (out <= 1.0)))  # sigmoid range

    # Loose tolerance: bf16 MXU operands (f32 accumulation) vs HIGHEST-
    # precision f32 reference.
    ref = output_layer_ref(x, raw, normalization=True)
    err = float(jnp.max(jnp.abs(out - ref)))
    assert err < 3e-2, err

    # --- normalization=False fast path (offline-folded single matmul) --------
    out_nn = jax.block_until_ready(
        output_layer_forward(x, prepared, normalization=False))
    ref_nn = output_layer_ref(x, raw, normalization=False)
    assert out_nn.shape == (num_nodes, 2), out_nn.shape
    err_nn = float(jnp.max(jnp.abs(out_nn - ref_nn)))
    assert err_nn < 3e-2, err_nn

    print("KERNEL_OK")
</pallas_src>

<mosaic_0001>
module attributes {stable_mosaic.version = 11 : i64} {
  func.func @_output_layer_norm_kernel(%arg0: memref<16x1024xbf16, #tpu.memory_space<vmem>>, %arg1: memref<1024x128xbf16, #tpu.memory_space<vmem>>, %arg2: memref<1x128xf32, #tpu.memory_space<vmem>>, %arg3: memref<16x128xf32, #tpu.memory_space<vmem>>, %arg4: memref<16x128xf32, #tpu.memory_space<vmem>>, %arg5: memref<128x128xbf16, #tpu.memory_space<vmem>>, %arg6: memref<1x128xf32, #tpu.memory_space<vmem>>, %arg7: memref<16x128xf32, #tpu.memory_space<vmem>>) attributes {dimension_semantics = [], scalar_prefetch = 0 : i64, scratch_operands = 0 : i64, tpu.core_type = #tpu.core_type<tc>} {
    %c0 = arith.constant 0 : index
    %c0_0 = arith.constant 0 : index
    %0 = vector.load %arg0[%c0, %c0_0] : memref<16x1024xbf16, #tpu.memory_space<vmem>>, vector<16x1024xbf16>
    %c0_1 = arith.constant 0 : index
    %c0_2 = arith.constant 0 : index
    %1 = vector.load %arg1[%c0_1, %c0_2] : memref<1024x128xbf16, #tpu.memory_space<vmem>>, vector<1024x128xbf16>
    %cst = arith.constant dense<0.000000e+00> : vector<16x128xf32>
    %2 = tpu.matmul %0, %1, %cst {dimension_numbers = #tpu.dot_dimension_numbers<[1], [0], [0], [1], [0, 0, 1, 1], [], []>} : vector<16x1024xbf16>, vector<1024x128xbf16>, vector<16x128xf32> -> vector<16x128xf32>
    %c0_3 = arith.constant 0 : index
    %c0_4 = arith.constant 0 : index
    %3 = vector.load %arg2[%c0_3, %c0_4] : memref<1x128xf32, #tpu.memory_space<vmem>>, vector<1x128xf32>
    %4 = vector.broadcast %3 : vector<1x128xf32> to vector<16x128xf32>
    %5 = arith.addf %2, %4 : vector<16x128xf32>
    %6 = vector.shape_cast %5 : vector<16x128xf32> to vector<1x16x128xf32>
    %cst_5 = arith.constant dense<0.000000e+00> : vector<1xf32>
    %7 = vector.multi_reduction <add>, %6, %cst_5 [1, 2] : vector<1x16x128xf32> to vector<1xf32>
    %8 = vector.shape_cast %7 : vector<1xf32> to vector<1x1x1xf32>
    %9 = vector.extract %8[0, 0, 0] : f32 from vector<1x1x1xf32>
    %10 = vector.broadcast %9 : f32 to vector<1x1xf32>
    %11 = arith.mulf %5, %5 : vector<16x128xf32>
    %12 = vector.shape_cast %11 : vector<16x128xf32> to vector<1x16x128xf32>
    %cst_6 = arith.constant dense<0.000000e+00> : vector<1xf32>
    %13 = vector.multi_reduction <add>, %12, %cst_6 [1, 2] : vector<1x16x128xf32> to vector<1xf32>
    %14 = vector.shape_cast %13 : vector<1xf32> to vector<1x1x1xf32>
    %15 = vector.extract %14[0, 0, 0] : f32 from vector<1x1x1xf32>
    %16 = vector.broadcast %15 : f32 to vector<1x1xf32>
    %cst_7 = arith.constant 4.8828125E-4 : f32
    %17 = vector.broadcast %cst_7 : f32 to vector<1x1xf32>
    %18 = arith.mulf %10, %17 : vector<1x1xf32>
    %cst_8 = arith.constant 4.8828125E-4 : f32
    %19 = vector.broadcast %cst_8 : f32 to vector<1x1xf32>
    %20 = arith.mulf %16, %19 : vector<1x1xf32>
    %21 = arith.mulf %18, %18 : vector<1x1xf32>
    %22 = arith.subf %20, %21 : vector<1x1xf32>
    %cst_9 = arith.constant 9.99999974E-6 : f32
    %23 = vector.broadcast %cst_9 : f32 to vector<1x1xf32>
    %24 = arith.addf %22, %23 : vector<1x1xf32>
    %25 = math.rsqrt %24 : vector<1x1xf32>
    %cst_10 = arith.constant 0.000000e+00 : f32
    %26 = vector.broadcast %cst_10 : f32 to vector<1x1xf32>
    %27 = arith.subf %26, %18 : vector<1x1xf32>
    %28 = arith.mulf %27, %25 : vector<1x1xf32>
    %29 = vector.broadcast %25 : vector<1x1xf32> to vector<16x128xf32>
    %30 = arith.mulf %5, %29 : vector<16x128xf32>
    %31 = vector.broadcast %28 : vector<1x1xf32> to vector<16x128xf32>
    %32 = arith.addf %30, %31 : vector<16x128xf32>
    %c0_11 = arith.constant 0 : index
    %c0_12 = arith.constant 0 : index
    %33 = vector.load %arg3[%c0_11, %c0_12] : memref<16x128xf32, #tpu.memory_space<vmem>>, vector<16x128xf32>
    %34 = arith.mulf %32, %33 : vector<16x128xf32>
    %c0_13 = arith.constant 0 : index
    %c0_14 = arith.constant 0 : index
    %35 = vector.load %arg4[%c0_13, %c0_14] : memref<16x128xf32, #tpu.memory_space<vmem>>, vector<16x128xf32>
    %36 = arith.addf %34, %35 : vector<16x128xf32>
    %37 = arith.truncf %36 : vector<16x128xf32> to vector<16x128xbf16>
    %c0_15 = arith.constant 0 : index
    %c0_16 = arith.constant 0 : index
    %38 = vector.load %arg5[%c0_15, %c0_16] : memref<128x128xbf16, #tpu.memory_space<vmem>>, vector<128x128xbf16>
    %cst_17 = arith.constant dense<0.000000e+00> : vector<16x128xf32>
    %39 = tpu.matmul %37, %38, %cst_17 {dimension_numbers = #tpu.dot_dimension_numbers<[1], [0], [0], [1], [0, 0, 1, 1], [], []>} : vector<16x128xbf16>, vector<128x128xbf16>, vector<16x128xf32> -> vector<16x128xf32>
    %c0_18 = arith.constant 0 : index
    %c0_19 = arith.constant 0 : index
    %40 = vector.load %arg6[%c0_18, %c0_19] : memref<1x128xf32, #tpu.memory_space<vmem>>, vector<1x128xf32>
    %41 = vector.broadcast %40 : vector<1x128xf32> to vector<16x128xf32>
    %42 = arith.addf %39, %41 : vector<16x128xf32>
    %cst_20 = arith.constant 5.000000e-01 : f32
    %43 = vector.broadcast %cst_20 : f32 to vector<16x128xf32>
    %44 = arith.mulf %43, %42 : vector<16x128xf32>
    %45 = math.tanh %44 : vector<16x128xf32>
    %cst_21 = arith.constant 1.000000e+00 : f32
    %46 = vector.broadcast %cst_21 : f32 to vector<16x128xf32>
    %47 = arith.addf %45, %46 : vector<16x128xf32>
    %cst_22 = arith.constant 5.000000e-01 : f32
    %48 = vector.broadcast %cst_22 : f32 to vector<16x128xf32>
    %49 = arith.mulf %48, %47 : vector<16x128xf32>
    %c0_23 = arith.constant 0 : index
    %c0_24 = arith.constant 0 : index
    %50 = vector.load %arg7[%c0_23, %c0_24] : memref<16x128xf32, #tpu.memory_space<vmem>>, vector<16x128xf32>
    tpu.vector_store %arg7[%c0_23, %c0_24], %49 {strides = array<i32>} : memref<16x128xf32, #tpu.memory_space<vmem>>, vector<16x128xf32>,
    return
  }
}

</mosaic_0001>

<llo_original>
// kernel: output_layer_forward.1
$region0: #{output_layer_forward.1}
  #allocation0 [shape = 'u32[]', space=smem, size = 0x4, offset = 0x4, fixed_abs, tag = 'smem constant byte address 0x4 - core index']
  #allocation1 [shape = 'u32[144,128]{1,0:T(1,128)}', space=vmem, size = 0x12000, scoped, tag = 'internal scratch']
  %s0 = inlined_call_operand.vmem [shape: bf16[16,1024], index: 0, kind: input, shape index: {}]
  %s1 = inlined_call_operand.hbm [shape: bf16[1024,128], index: 1, kind: input, shape index: {}]
  %s2 = inlined_call_operand.vmem [shape: f32[1,128], index: 2, kind: input, shape index: {}]
  %s3 = inlined_call_operand.vmem [shape: f32[16,128], index: 3, kind: input, shape index: {}]
  %s4 = inlined_call_operand.vmem [shape: f32[16,128], index: 4, kind: input, shape index: {}]
  %s5 = inlined_call_operand.vmem [shape: bf16[128,128], index: 5, kind: input, shape index: {}]
  %s6 = inlined_call_operand.vmem [shape: f32[1,128], index: 6, kind: input, shape index: {}]
  %s7 = inlined_call_operand.vmem [shape: f32[16,128], index: 7, kind: output, shape index: {}]
  %s8 = sld [smem:[#allocation0]]
  $region42: #{output_layer_forward.1} parent=0
    _
  %s10 = ssub.s32 1, %s8
  %s11 = scalar_select 0, %s10, %s8
  $region1: #{output_layer_forward.1} parent=0
    #allocation2 [shape = 'u8[262144]{0}', space=vmem, size = 0x40000, scoped, tag = 'input window, operand 1, single buffered']
    #allocation3 [shape = 's32[1]{0}', space=sflag, size = 0x4, scoped, tag = 'scoped memory for output_layer_forward.1']
    %12 = vsyncpa [#allocation3], 0
    // Predicated region
    $region2: #{output_layer_forward.1} parent=1 // pred_check
      _
    $region3: #{output_layer_forward.1} parent=1 // pred_check_branch
      %14 = sbr.rel (0) target = $region5
    $region4: #{output_layer_forward.1} parent=1 // pred_region
      _
    $region5: #{output_layer_forward.1} parent=1 // pred_fallthru
      _
    // Predicated region
    $region6: #{output_layer_forward.1} parent=1 // pred_check
      _
    $region7: #{output_layer_forward.1} parent=1 // pred_check_branch
      %16 = sbr.rel (0) target = $region9
    $region8: #{output_layer_forward.1} parent=1 // pred_region
      %s18 = ssub.s32 8192, 8192
      %19 = vsyncadd [#allocation3], %s18
      %s20 = sshll.u32 [#allocation2], 4
      %s21 = int_to_ptr.vmem [resolvable:$true] %s20
      %26 = dma.hbm_to_vmem [thread:$0]  %s1, 8192, %s21, [#allocation3], 64, 64, 4
    $region9: #{output_layer_forward.1} parent=1 // pred_fallthru
      _
    // Predicated region
    $region10: #{output_layer_forward.1} parent=1 // pred_check
      _
    $region11: #{output_layer_forward.1} parent=1 // pred_check_branch
      %28 = sbr.rel (0) target = $region13
    $region12: #{output_layer_forward.1} parent=1 // pred_region
      _
    $region13: #{output_layer_forward.1} parent=1 // pred_fallthru
      _
    // Predicated region
    $region14: #{output_layer_forward.1} parent=1 // pred_check
      _
    $region15: #{output_layer_forward.1} parent=1 // pred_check_branch
      %30 = sbr.rel (0) target = $region17
    $region16: #{output_layer_forward.1} parent=1 // pred_region
      _
    $region17: #{output_layer_forward.1} parent=1 // pred_fallthru
      _
    // Predicated region
    $region18: #{output_layer_forward.1} parent=1 // pred_check
      _
    $region19: #{output_layer_forward.1} parent=1 // pred_check_branch
      %32 = sbr.rel (0) target = $region21
    $region20: #{output_layer_forward.1} parent=1 // pred_region
      _
    $region21: #{output_layer_forward.1} parent=1 // pred_fallthru
      _
    // Predicated region
    $region22: #{output_layer_forward.1} parent=1 // pred_check
      _
    $region23: #{output_layer_forward.1} parent=1 // pred_check_branch
      %34 = sbr.rel (0) target = $region25
    $region24: #{output_layer_forward.1} parent=1 // pred_region
      _
    $region25: #{output_layer_forward.1} parent=1 // pred_fallthru
      _
    // Predicated region
    $region26: #{output_layer_forward.1} parent=1 // pred_check
      _
    $region27: #{output_layer_forward.1} parent=1 // pred_check_branch
      %36 = sbr.rel (0) target = $region29
    $region28: #{output_layer_forward.1} parent=1 // pred_region
      _
    $region29: #{output_layer_forward.1} parent=1 // pred_fallthru
      _
    // Predicated region
    $region30: #{output_layer_forward.1} parent=1 // pred_check
      _
    $region31: #{output_layer_forward.1} parent=1 // pred_check_branch
      %38 = sbr.rel (0) target = $region33
    $region32: #{output_layer_forward.1} parent=1 // pred_region
      %39 = dma.done [#allocation3], 8192
    $region33: #{output_layer_forward.1} parent=1 // pred_fallthru
      _
    %v41 = vld [vmem:[%s0] sm:$0xff]
    %v42 = vld [vmem:[%s0 + $0x8] sm:$0xff]
    %v43 = vld [vmem:[%s0 + $0x10] sm:$0xff]
    %v44 = vld [vmem:[%s0 + $0x18] sm:$0xff]
    %v45 = vld [vmem:[%s0 + $0x20] sm:$0xff]
    %v46 = vld [vmem:[%s0 + $0x28] sm:$0xff]
    %v47 = vld [vmem:[%s0 + $0x30] sm:$0xff]
    %v48 = vld [vmem:[%s0 + $0x38] sm:$0xff]
    %v49 = vld [vmem:[#allocation2] sm:$0xf]
    %v50 = vld [vmem:[#allocation2 + $0x4] sm:$0xf]
    %v51 = vld [vmem:[#allocation2 + $0x8] sm:$0xf]
    %v52 = vld [vmem:[#allocation2 + $0xc] sm:$0xf]
    %v53 = vld [vmem:[#allocation2 + $0x10] sm:$0xf]
    %v54 = vld [vmem:[#allocation2 + $0x14] sm:$0xf]
    %v55 = vld [vmem:[#allocation2 + $0x18] sm:$0xf]
    %v56 = vld [vmem:[#allocation2 + $0x1c] sm:$0xf]
    %v57 = vld [vmem:[#allocation2 + $0x20] sm:$0xf]
    %v58 = vld [vmem:[#allocation2 + $0x24] sm:$0xf]
    %v59 = vld [vmem:[#allocation2 + $0x28] sm:$0xf]
    %v60 = vld [vmem:[#allocation2 + $0x2c] sm:$0xf]
    %v61 = vld [vmem:[#allocation2 + $0x30] sm:$0xf]
    %v62 = vld [vmem:[#allocation2 + $0x34] sm:$0xf]
    %v63 = vld [vmem:[#allocation2 + $0x38] sm:$0xf]
    %v64 = vld [vmem:[#allocation2 + $0x3c] sm:$0xf]
    %v65 = vld [vmem:[#allocation2 + $0x40] sm:$0xf]
    %v66 = vld [vmem:[#allocation2 + $0x44] sm:$0xf]
    %v67 = vld [vmem:[#allocation2 + $0x48] sm:$0xf]
    %v68 = vld [vmem:[#allocation2 + $0x4c] sm:$0xf]
    %v69 = vld [vmem:[#allocation2 + $0x50] sm:$0xf]
    %v70 = vld [vmem:[#allocation2 + $0x54] sm:$0xf]
    %v71 = vld [vmem:[#allocation2 + $0x58] sm:$0xf]
    %v72 = vld [vmem:[#allocation2 + $0x5c] sm:$0xf]
    %v73 = vld [vmem:[#allocation2 + $0x60] sm:$0xf]
    %v74 = vld [vmem:[#allocation2 + $0x64] sm:$0xf]
    %v75 = vld [vmem:[#allocation2 + $0x68] sm:$0xf]
    %v76 = vld [vmem:[#allocation2 + $0x6c] sm:$0xf]
    %v77 = vld [vmem:[#allocation2 + $0x70] sm:$0xf]
    %v78 = vld [vmem:[#allocation2 + $0x74] sm:$0xf]
    %v79 = vld [vmem:[#allocation2 + $0x78] sm:$0xf]
    %v80 = vld [vmem:[#allocation2 + $0x7c] sm:$0xf]
    %v81 = vld [vmem:[#allocation2 + $0x80] sm:$0xf]
    %v82 = vld [vmem:[#allocation2 + $0x84] sm:$0xf]
    %v83 = vld [vmem:[#allocation2 + $0x88] sm:$0xf]
    %v84 = vld [vmem:[#allocation2 + $0x8c] sm:$0xf]
    %v85 = vld [vmem:[#allocation2 + $0x90] sm:$0xf]
    %v86 = vld [vmem:[#allocation2 + $0x94] sm:$0xf]
    %v87 = vld [vmem:[#allocation2 + $0x98] sm:$0xf]
    %v88 = vld [vmem:[#allocation2 + $0x9c] sm:$0xf]
    %v89 = vld [vmem:[#allocation2 + $0xa0] sm:$0xf]
    %v90 = vld [vmem:[#allocation2 + $0xa4] sm:$0xf]
    %v91 = vld [vmem:[#allocation2 + $0xa8] sm:$0xf]
    %v92 = vld [vmem:[#allocation2 + $0xac] sm:$0xf]
    %v93 = vld [vmem:[#allocation2 + $0xb0] sm:$0xf]
    %v94 = vld [vmem:[#allocation2 + $0xb4] sm:$0xf]
    %v95 = vld [vmem:[#allocation2 + $0xb8] sm:$0xf]
    %v96 = vld [vmem:[#allocation2 + $0xbc] sm:$0xf]
    %v97 = vld [vmem:[#allocation2 + $0xc0] sm:$0xf]
    %v98 = vld [vmem:[#allocation2 + $0xc4] sm:$0xf]
    %v99 = vld [vmem:[#allocation2 + $0xc8] sm:$0xf]
    %v100 = vld [vmem:[#allocation2 + $0xcc] sm:$0xf]
    %v101 = vld [vmem:[#allocation2 + $0xd0] sm:$0xf]
    %v102 = vld [vmem:[#allocation2 + $0xd4] sm:$0xf]
    %v103 = vld [vmem:[#allocation2 + $0xd8] sm:$0xf]
    %v104 = vld [vmem:[#allocation2 + $0xdc] sm:$0xf]
    %v105 = vld [vmem:[#allocation2 + $0xe0] sm:$0xf]
    %v106 = vld [vmem:[#allocation2 + $0xe4] sm:$0xf]
    %v107 = vld [vmem:[#allocation2 + $0xe8] sm:$0xf]
    %v108 = vld [vmem:[#allocation2 + $0xec] sm:$0xf]
    %v109 = vld [vmem:[#allocation2 + $0xf0] sm:$0xf]
    %v110 = vld [vmem:[#allocation2 + $0xf4] sm:$0xf]
    %v111 = vld [vmem:[#allocation2 + $0xf8] sm:$0xf]
    %v112 = vld [vmem:[#allocation2 + $0xfc] sm:$0xf]
    %v113 = vld [vmem:[#allocation2 + $0x100] sm:$0xf]
    %v114 = vld [vmem:[#allocation2 + $0x104] sm:$0xf]
    %v115 = vld [vmem:[#allocation2 + $0x108] sm:$0xf]
    %v116 = vld [vmem:[#allocation2 + $0x10c] sm:$0xf]
    %v117 = vld [vmem:[#allocation2 + $0x110] sm:$0xf]
    %v118 = vld [vmem:[#allocation2 + $0x114] sm:$0xf]
    %v119 = vld [vmem:[#allocation2 + $0x118] sm:$0xf]
    %v120 = vld [vmem:[#allocation2 + $0x11c] sm:$0xf]
    %v121 = vld [vmem:[#allocation2 + $0x120] sm:$0xf]
    %v122 = vld [vmem:[#allocation2 + $0x124] sm:$0xf]
    %v123 = vld [vmem:[#allocation2 + $0x128] sm:$0xf]
    %v124 = vld [vmem:[#allocation2 + $0x12c] sm:$0xf]
    %v125 = vld [vmem:[#allocation2 + $0x130] sm:$0xf]
    %v126 = vld [vmem:[#allocation2 + $0x134] sm:$0xf]
    %v127 = vld [vmem:[#allocation2 + $0x138] sm:$0xf]
    %v128 = vld [vmem:[#allocation2 + $0x13c] sm:$0xf]
    %v129 = vld [vmem:[#allocation2 + $0x140] sm:$0xf]
    %v130 = vld [vmem:[#allocation2 + $0x144] sm:$0xf]
    %v131 = vld [vmem:[#allocation2 + $0x148] sm:$0xf]
    %v132 = vld [vmem:[#allocation2 + $0x14c] sm:$0xf]
    %v133 = vld [vmem:[#allocation2 + $0x150] sm:$0xf]
    %v134 = vld [vmem:[#allocation2 + $0x154] sm:$0xf]
    %v135 = vld [vmem:[#allocation2 + $0x158] sm:$0xf]
    %v136 = vld [vmem:[#allocation2 + $0x15c] sm:$0xf]
    %v137 = vld [vmem:[#allocation2 + $0x160] sm:$0xf]
    %v138 = vld [vmem:[#allocation2 + $0x164] sm:$0xf]
    %v139 = vld [vmem:[#allocation2 + $0x168] sm:$0xf]
    %v140 = vld [vmem:[#allocation2 + $0x16c] sm:$0xf]
    %v141 = vld [vmem:[#allocation2 + $0x170] sm:$0xf]
    %v142 = vld [vmem:[#allocation2 + $0x174] sm:$0xf]
    %v143 = vld [vmem:[#allocation2 + $0x178] sm:$0xf]
    %v144 = vld [vmem:[#allocation2 + $0x17c] sm:$0xf]
    %v145 = vld [vmem:[#allocation2 + $0x180] sm:$0xf]
    %v146 = vld [vmem:[#allocation2 + $0x184] sm:$0xf]
    %v147 = vld [vmem:[#allocation2 + $0x188] sm:$0xf]
    %v148 = vld [vmem:[#allocation2 + $0x18c] sm:$0xf]
    %v149 = vld [vmem:[#allocation2 + $0x190] sm:$0xf]
    %v150 = vld [vmem:[#allocation2 + $0x194] sm:$0xf]
    %v151 = vld [vmem:[#allocation2 + $0x198] sm:$0xf]
    %v152 = vld [vmem:[#allocation2 + $0x19c] sm:$0xf]
    %v153 = vld [vmem:[#allocation2 + $0x1a0] sm:$0xf]
    %v154 = vld [vmem:[#allocation2 + $0x1a4] sm:$0xf]
    %v155 = vld [vmem:[#allocation2 + $0x1a8] sm:$0xf]
    %v156 = vld [vmem:[#allocation2 + $0x1ac] sm:$0xf]
    %v157 = vld [vmem:[#allocation2 + $0x1b0] sm:$0xf]
    %v158 = vld [vmem:[#allocation2 + $0x1b4] sm:$0xf]
    %v159 = vld [vmem:[#allocation2 + $0x1b8] sm:$0xf]
    %v160 = vld [vmem:[#allocation2 + $0x1bc] sm:$0xf]
    %v161 = vld [vmem:[#allocation2 + $0x1c0] sm:$0xf]
    %v162 = vld [vmem:[#allocation2 + $0x1c4] sm:$0xf]
    %v163 = vld [vmem:[#allocation2 + $0x1c8] sm:$0xf]
    %v164 = vld [vmem:[#allocation2 + $0x1cc] sm:$0xf]
    %v165 = vld [vmem:[#allocation2 + $0x1d0] sm:$0xf]
    %v166 = vld [vmem:[#allocation2 + $0x1d4] sm:$0xf]
    %v167 = vld [vmem:[#allocation2 + $0x1d8] sm:$0xf]
    %v168 = vld [vmem:[#allocation2 + $0x1dc] sm:$0xf]
    %v169 = vld [vmem:[#allocation2 + $0x1e0] sm:$0xf]
    %v170 = vld [vmem:[#allocation2 + $0x1e4] sm:$0xf]
    %v171 = vld [vmem:[#allocation2 + $0x1e8] sm:$0xf]
    %v172 = vld [vmem:[#allocation2 + $0x1ec] sm:$0xf]
    %v173 = vld [vmem:[#allocation2 + $0x1f0] sm:$0xf]
    %v174 = vld [vmem:[#allocation2 + $0x1f4] sm:$0xf]
    %v175 = vld [vmem:[#allocation2 + $0x1f8] sm:$0xf]
    %v176 = vld [vmem:[#allocation2 + $0x1fc] sm:$0xf]
    %v177 = vld [vmem:[%s2] sm:$0x1]
    %v179 = vlaneseq
    %v180 = vshrl.u32 %v179, 7
    %v181 = vsub.s32 0, %v180
    %v182 = vrot.slane %v177, %v181
    %v192 = vunpack.c.l.b16 %v41
    %v193 = vunpack.c.h.b16 %v41
    %v194 = vunpack.c.l.b16 %v42
    %v195 = vunpack.c.h.b16 %v42
    %v196 = vunpack.c.l.b16 %v43
    %v197 = vunpack.c.h.b16 %v43
    %v198 = vunpack.c.l.b16 %v44
    %v199 = vunpack.c.h.b16 %v44
    %v200 = vunpack.c.l.b16 %v45
    %v201 = vunpack.c.h.b16 %v45
    %v202 = vunpack.c.l.b16 %v46
    %v203 = vunpack.c.h.b16 %v46
    %v204 = vunpack.c.l.b16 %v47
    %v205 = vunpack.c.h.b16 %v47
    %v206 = vunpack.c.l.b16 %v48
    %v207 = vunpack.c.h.b16 %v48
    %v208 = vpack.c.b16 %v200, %v192
    %v209 = vpack.c.b16 %v201, %v193
    %v210 = vpack.c.b16 %v202, %v194
    %v211 = vpack.c.b16 %v203, %v195
    %v212 = vpack.c.b16 %v204, %v196
    %v213 = vpack.c.b16 %v205, %v197
    %v214 = vpack.c.b16 %v206, %v198
    %v215 = vpack.c.b16 %v207, %v199
    %v352 = vunpack.c.l.b16 %v49
    %v353 = vunpack.c.l.b16 %v50
    %v354 = vunpack.c.l.b16 %v51
    %v355 = vunpack.c.l.b16 %v52
    %v356 = vunpack.c.l.b16 %v53
    %v357 = vunpack.c.l.b16 %v54
    %v358 = vunpack.c.l.b16 %v55
    %v359 = vunpack.c.l.b16 %v56
    %v360 = vunpack.c.l.b16 %v57
    %v361 = vunpack.c.l.b16 %v58
    %v362 = vunpack.c.l.b16 %v59
    %v363 = vunpack.c.l.b16 %v60
    %v364 = vunpack.c.l.b16 %v61
    %v365 = vunpack.c.l.b16 %v62
    %v366 = vunpack.c.l.b16 %v63
    %v367 = vunpack.c.l.b16 %v64
    %v368 = vunpack.c.l.b16 %v65
    %v369 = vunpack.c.l.b16 %v66
    %v370 = vunpack.c.l.b16 %v67
    %v371 = vunpack.c.l.b16 %v68
    %v372 = vunpack.c.l.b16 %v69
    %v373 = vunpack.c.l.b16 %v70
    %v374 = vunpack.c.l.b16 %v71
    %v375 = vunpack.c.l.b16 %v72
    %v376 = vunpack.c.l.b16 %v73
    %v377 = vunpack.c.l.b16 %v74
    %v378 = vunpack.c.l.b16 %v75
    %v379 = vunpack.c.l.b16 %v76
    %v380 = vunpack.c.l.b16 %v77
    %v381 = vunpack.c.l.b16 %v78
    %v382 = vunpack.c.l.b16 %v79
    %v383 = vunpack.c.l.b16 %v80
    %v384 = vunpack.c.l.b16 %v81
    %v385 = vunpack.c.l.b16 %v82
    %v386 = vunpack.c.l.b16 %v83
    %v387 = vunpack.c.l.b16 %v84
    %v388 = vunpack.c.l.b16 %v85
    %v389 = vunpack.c.l.b16 %v86
    %v390 = vunpack.c.l.b16 %v87
    %v391 = vunpack.c.l.b16 %v88
    %v392 = vunpack.c.l.b16 %v89
    %v393 = vunpack.c.l.b16 %v90
    %v394 = vunpack.c.l.b16 %v91
    %v395 = vunpack.c.l.b16 %v92
    %v396 = vunpack.c.l.b16 %v93
    %v397 = vunpack.c.l.b16 %v94
    %v398 = vunpack.c.l.b16 %v95
    %v399 = vunpack.c.l.b16 %v96
    %v400 = vunpack.c.l.b16 %v97
    %v401 = vunpack.c.l.b16 %v98
    %v402 = vunpack.c.l.b16 %v99
    %v403 = vunpack.c.l.b16 %v100
    %v404 = vunpack.c.l.b16 %v101
    %v405 = vunpack.c.l.b16 %v102
    %v406 = vunpack.c.l.b16 %v103
    %v407 = vunpack.c.l.b16 %v104
    %v408 = vunpack.c.l.b16 %v105
    %v409 = vunpack.c.l.b16 %v106
    %v410 = vunpack.c.l.b16 %v107
    %v411 = vunpack.c.l.b16 %v108
    %v412 = vunpack.c.l.b16 %v109
    %v413 = vunpack.c.l.b16 %v110
    %v414 = vunpack.c.l.b16 %v111
    %v415 = vunpack.c.l.b16 %v112
    %v416 = vunpack.c.l.b16 %v113
    %v417 = vunpack.c.l.b16 %v114
    %v418 = vunpack.c.l.b16 %v115
    %v419 = vunpack.c.l.b16 %v116
    %v420 = vunpack.c.l.b16 %v117
    %v421 = vunpack.c.l.b16 %v118
    %v422 = vunpack.c.l.b16 %v119
    %v423 = vunpack.c.l.b16 %v120
    %v424 = vunpack.c.l.b16 %v121
    %v425 = vunpack.c.l.b16 %v122
    %v426 = vunpack.c.l.b16 %v123
    %v427 = vunpack.c.l.b16 %v124
    %v428 = vunpack.c.l.b16 %v125
    %v429 = vunpack.c.l.b16 %v126
    %v430 = vunpack.c.l.b16 %v127
    %v431 = vunpack.c.l.b16 %v128
    %v432 = vunpack.c.l.b16 %v129
    %v433 = vunpack.c.l.b16 %v130
    %v434 = vunpack.c.l.b16 %v131
    %v435 = vunpack.c.l.b16 %v132
    %v436 = vunpack.c.l.b16 %v133
    %v437 = vunpack.c.l.b16 %v134
    %v438 = vunpack.c.l.b16 %v135
    %v439 = vunpack.c.l.b16 %v136
    %v440 = vunpack.c.l.b16 %v137
    %v441 = vunpack.c.l.b16 %v138
    %v442 = vunpack.c.l.b16 %v139
    %v443 = vunpack.c.l.b16 %v140
    %v444 = vunpack.c.l.b16 %v141
    %v445 = vunpack.c.l.b16 %v142
    %v446 = vunpack.c.l.b16 %v143
    %v447 = vunpack.c.l.b16 %v144
    %v448 = vunpack.c.l.b16 %v145
    %v449 = vunpack.c.l.b16 %v146
    %v450 = vunpack.c.l.b16 %v147
    %v451 = vunpack.c.l.b16 %v148
    %v452 = vunpack.c.l.b16 %v149
    %v453 = vunpack.c.l.b16 %v150
    %v454 = vunpack.c.l.b16 %v151
    %v455 = vunpack.c.l.b16 %v152
    %v456 = vunpack.c.l.b16 %v153
    %v457 = vunpack.c.l.b16 %v154
    %v458 = vunpack.c.l.b16 %v155
    %v459 = vunpack.c.l.b16 %v156
    %v460 = vunpack.c.l.b16 %v157
    %v461 = vunpack.c.l.b16 %v158
    %v462 = vunpack.c.l.b16 %v159
    %v463 = vunpack.c.l.b16 %v160
    %v464 = vunpack.c.l.b16 %v161
    %v465 = vunpack.c.l.b16 %v162
    %v466 = vunpack.c.l.b16 %v163
    %v467 = vunpack.c.l.b16 %v164
    %v468 = vunpack.c.l.b16 %v165
    %v469 = vunpack.c.l.b16 %v166
    %v470 = vunpack.c.l.b16 %v167
    %v471 = vunpack.c.l.b16 %v168
    %v472 = vunpack.c.l.b16 %v169
    %v473 = vunpack.c.l.b16 %v170
    %v474 = vunpack.c.l.b16 %v171
    %v475 = vunpack.c.l.b16 %v172
    %v476 = vunpack.c.l.b16 %v173
    %v477 = vunpack.c.l.b16 %v174
    %v478 = vunpack.c.l.b16 %v175
    %v479 = vunpack.c.l.b16 %v176
    %v480 = vpack.c.b16 %v353, %v352
    %v481 = vpack.c.b16 %v355, %v354
    %v482 = vpack.c.b16 %v357, %v356
    %v483 = vpack.c.b16 %v359, %v358
    %v484 = vpack.c.b16 %v361, %v360
    %v485 = vpack.c.b16 %v363, %v362
    %v486 = vpack.c.b16 %v365, %v364
    %v487 = vpack.c.b16 %v367, %v366
    %v488 = vpack.c.b16 %v369, %v368
    %v489 = vpack.c.b16 %v371, %v370
    %v490 = vpack.c.b16 %v373, %v372
    %v491 = vpack.c.b16 %v375, %v374
    %v492 = vpack.c.b16 %v377, %v376
    %v493 = vpack.c.b16 %v379, %v378
    %v494 = vpack.c.b16 %v381, %v380
    %v495 = vpack.c.b16 %v383, %v382
    %v496 = vpack.c.b16 %v385, %v384
    %v497 = vpack.c.b16 %v387, %v386
    %v498 = vpack.c.b16 %v389, %v388
    %v499 = vpack.c.b16 %v391, %v390
    %v500 = vpack.c.b16 %v393, %v392
    %v501 = vpack.c.b16 %v395, %v394
    %v502 = vpack.c.b16 %v397, %v396
    %v503 = vpack.c.b16 %v399, %v398
    %v504 = vpack.c.b16 %v401, %v400
    %v505 = vpack.c.b16 %v403, %v402
    %v506 = vpack.c.b16 %v405, %v404
    %v507 = vpack.c.b16 %v407, %v406
    %v508 = vpack.c.b16 %v409, %v408
    %v509 = vpack.c.b16 %v411, %v410
    %v510 = vpack.c.b16 %v413, %v412
    %v511 = vpack.c.b16 %v415, %v414
    %v512 = vpack.c.b16 %v417, %v416
    %v513 = vpack.c.b16 %v419, %v418
    %v514 = vpack.c.b16 %v421, %v420
    %v515 = vpack.c.b16 %v423, %v422
    %v516 = vpack.c.b16 %v425, %v424
    %v517 = vpack.c.b16 %v427, %v426
    %v518 = vpack.c.b16 %v429, %v428
    %v519 = vpack.c.b16 %v431, %v430
    %v520 = vpack.c.b16 %v433, %v432
    %v521 = vpack.c.b16 %v435, %v434
    %v522 = vpack.c.b16 %v437, %v436
    %v523 = vpack.c.b16 %v439, %v438
    %v524 = vpack.c.b16 %v441, %v440
    %v525 = vpack.c.b16 %v443, %v442
    %v526 = vpack.c.b16 %v445, %v444
    %v527 = vpack.c.b16 %v447, %v446
    %v528 = vpack.c.b16 %v449, %v448
    %v529 = vpack.c.b16 %v451, %v450
    %v530 = vpack.c.b16 %v453, %v452
    %v531 = vpack.c.b16 %v455, %v454
    %v532 = vpack.c.b16 %v457, %v456
    %v533 = vpack.c.b16 %v459, %v458
    %v534 = vpack.c.b16 %v461, %v460
    %v535 = vpack.c.b16 %v463, %v462
    %v536 = vpack.c.b16 %v465, %v464
    %v537 = vpack.c.b16 %v467, %v466
    %v538 = vpack.c.b16 %v469, %v468
    %v539 = vpack.c.b16 %v471, %v470
    %v540 = vpack.c.b16 %v473, %v472
    %v541 = vpack.c.b16 %v475, %v474
    %v542 = vpack.c.b16 %v477, %v476
    %v543 = vpack.c.b16 %v479, %v478
    %608 = vmatprep.subr.bf16.mxu0 0
    %609 = vmatpush1.bf16.msra.mxu0 %v480
    %610 = vmatprep.subr.bf16.mxu0 0
    %611 = vmatpush1.bf16.msra.mxu0 %v481
    %612 = vmatprep.subr.bf16.mxu0 0
    %613 = vmatpush1.bf16.msra.mxu0 %v482
    %614 = vmatprep.subr.bf16.mxu0 0
    %615 = vmatpush1.bf16.msra.mxu0 %v483
    %616 = vmatprep.subr.bf16.mxu0 0
    %617 = vmatpush1.bf16.msra.mxu0 %v484
    %618 = vmatprep.subr.bf16.mxu0 0
    %619 = vmatpush1.bf16.msra.mxu0 %v485
    %620 = vmatprep.subr.bf16.mxu0 0
    %621 = vmatpush1.bf16.msra.mxu0 %v486
    %622 = vmatprep.subr.bf16.mxu0 0
    %623 = vmatpush1.bf16.msra.mxu0 %v487
    %624 = vmatprep.subr.bf16.mxu0 0
    %625 = vmatpush1.bf16.msra.mxu0 %v488
    %626 = vmatprep.subr.bf16.mxu0 0
    %627 = vmatpush1.bf16.msra.mxu0 %v489
    %628 = vmatprep.subr.bf16.mxu0 0
    %629 = vmatpush1.bf16.msra.mxu0 %v490
    %630 = vmatprep.subr.bf16.mxu0 0
    %631 = vmatpush1.bf16.msra.mxu0 %v491
    %632 = vmatprep.subr.bf16.mxu0 0
    %633 = vmatpush1.bf16.msra.mxu0 %v492
    %634 = vmatprep.subr.bf16.mxu0 0
    %635 = vmatpush1.bf16.msra.mxu0 %v493
    %636 = vmatprep.subr.bf16.mxu0 0
    %637 = vmatpush1.bf16.msra.mxu0 %v494
    %638 = vmatprep.subr.bf16.mxu0 0
    %639 = vmatpush1.bf16.msra.mxu0 %v495
    %640 = vmatprep.mubr.bf16.mxu0 %v209
    %641 = vmatmul.mubr.bf16.gmra.mrb[0].mxu0 %v208
    %v642 = vpop.f32.mrb[0].mxu0
    %v643 = vadd.f32 %v182, %v642
    %v644 = vpop.f32.mrb[0].mxu0
    %v645 = vpop.f32.mrb[0].mxu0
    %v646 = vadd.f32 %v182, %v645
    %v647 = vpop.f32.mrb[0].mxu0
    %648 = vdwg.mxu0
    %649 = vmatprep.subr.bf16.mxu0 0
    %650 = vmatpush1.bf16.msra.mxu0 %v496
    %651 = vmatprep.subr.bf16.mxu0 0
    %652 = vmatpush1.bf16.msra.mxu0 %v497
    %653 = vmatprep.subr.bf16.mxu0 0
    %654 = vmatpush1.bf16.msra.mxu0 %v498
    %655 = vmatprep.subr.bf16.mxu0 0
    %656 = vmatpush1.bf16.msra.mxu0 %v499
    %657 = vmatprep.subr.bf16.mxu0 0
    %658 = vmatpush1.bf16.msra.mxu0 %v500
    %659 = vmatprep.subr.bf16.mxu0 0
    %660 = vmatpush1.bf16.msra.mxu0 %v501
    %661 = vmatprep.subr.bf16.mxu0 0
    %662 = vmatpush1.bf16.msra.mxu0 %v502
    %663 = vmatprep.subr.bf16.mxu0 0
    %664 = vmatpush1.bf16.msra.mxu0 %v503
    %665 = vmatprep.subr.bf16.mxu0 0
    %666 = vmatpush1.bf16.msra.mxu0 %v504
    %667 = vmatprep.subr.bf16.mxu0 0
    %668 = vmatpush1.bf16.msra.mxu0 %v505
    %669 = vmatprep.subr.bf16.mxu0 0
    %670 = vmatpush1.bf16.msra.mxu0 %v506
    %671 = vmatprep.subr.bf16.mxu0 0
    %672 = vmatpush1.bf16.msra.mxu0 %v507
    %673 = vmatprep.subr.bf16.mxu0 0
    %674 = vmatpush1.bf16.msra.mxu0 %v508
    %675 = vmatprep.subr.bf16.mxu0 0
    %676 = vmatpush1.bf16.msra.mxu0 %v509
    %677 = vmatprep.subr.bf16.mxu0 0
    %678 = vmatpush1.bf16.msra.mxu0 %v510
    %679 = vmatprep.subr.bf16.mxu0 0
    %680 = vmatpush1.bf16.msra.mxu0 %v511
    %681 = vmatprep.mubr.bf16.mxu0 %v211
    %682 = vmatmul.mubr.bf16.gmra.mrb[0].mxu0 %v210
    %v683 = vpop.f32.mrb[0].mxu0
    %v684 = vadd.f32 %v643, %v683
    %v685 = vpop.f32.mrb[0].mxu0
    %v686 = vpop.f32.mrb[0].mxu0
    %v687 = vadd.f32 %v646, %v686
    %v688 = vpop.f32.mrb[0].mxu0
    %689 = vdwg.mxu0
    %690 = vmatprep.subr.bf16.mxu0 0
    %691 = vmatpush1.bf16.msra.mxu0 %v512
    %692 = vmatprep.subr.bf16.mxu0 0
    %693 = vmatpush1.bf16.msra.mxu0 %v513
    %694 = vmatprep.subr.bf16.mxu0 0
    %695 = vmatpush1.bf16.msra.mxu0 %v514
    %696 = vmatprep.subr.bf16.mxu0 0
    %697 = vmatpush1.bf16.msra.mxu0 %v515
    %698 = vmatprep.subr.bf16.mxu0 0
    %699 = vmatpush1.bf16.msra.mxu0 %v516
    %700 = vmatprep.subr.bf16.mxu0 0
    %701 = vmatpush1.bf16.msra.mxu0 %v517
    %702 = vmatprep.subr.bf16.mxu0 0
    %703 = vmatpush1.bf16.msra.mxu0 %v518
    %704 = vmatprep.subr.bf16.mxu0 0
    %705 = vmatpush1.bf16.msra.mxu0 %v519
    %706 = vmatprep.subr.bf16.mxu0 0
    %707 = vmatpush1.bf16.msra.mxu0 %v520
    %708 = vmatprep.subr.bf16.mxu0 0
    %709 = vmatpush1.bf16.msra.mxu0 %v521
    %710 = vmatprep.subr.bf16.mxu0 0
    %711 = vmatpush1.bf16.msra.mxu0 %v522
    %712 = vmatprep.subr.bf16.mxu0 0
    %713 = vmatpush1.bf16.msra.mxu0 %v523
    %714 = vmatprep.subr.bf16.mxu0 0
    %715 = vmatpush1.bf16.msra.mxu0 %v524
    %716 = vmatprep.subr.bf16.mxu0 0
    %717 = vmatpush1.bf16.msra.mxu0 %v525
    %718 = vmatprep.subr.bf16.mxu0 0
    %719 = vmatpush1.bf16.msra.mxu0 %v526
    %720 = vmatprep.subr.bf16.mxu0 0
    %721 = vmatpush1.bf16.msra.mxu0 %v527
    %722 = vmatprep.mubr.bf16.mxu0 %v213
    %723 = vmatmul.mubr.bf16.gmra.mrb[0].mxu0 %v212
    %v724 = vpop.f32.mrb[0].mxu0
    %v725 = vadd.f32 %v684, %v724
    %v726 = vpop.f32.mrb[0].mxu0
    %v727 = vpop.f32.mrb[0].mxu0
    %v728 = vadd.f32 %v687, %v727
    %v729 = vpop.f32.mrb[0].mxu0
    %730 = vdwg.mxu0
    %731 = vmatprep.subr.bf16.mxu0 0
    %732 = vmatpush1.bf16.msra.mxu0 %v528
    %733 = vmatprep.subr.bf16.mxu0 0
    %734 = vmatpush1.bf16.msra.mxu0 %v529
    %735 = vmatprep.subr.bf16.mxu0 0
    %736 = vmatpush1.bf16.msra.mxu0 %v530
    %737 = vmatprep.subr.bf16.mxu0 0
    %738 = vmatpush1.bf16.msra.mxu0 %v531
    %739 = vmatprep.subr.bf16.mxu0 0
    %740 = vmatpush1.bf16.msra.mxu0 %v532
    %741 = vmatprep.subr.bf16.mxu0 0
    %742 = vmatpush1.bf16.msra.mxu0 %v533
    %743 = vmatprep.subr.bf16.mxu0 0
    %744 = vmatpush1.bf16.msra.mxu0 %v534
    %745 = vmatprep.subr.bf16.mxu0 0
    %746 = vmatpush1.bf16.msra.mxu0 %v535
    %747 = vmatprep.subr.bf16.mxu0 0
    %748 = vmatpush1.bf16.msra.mxu0 %v536
    %749 = vmatprep.subr.bf16.mxu0 0
    %750 = vmatpush1.bf16.msra.mxu0 %v537
    %751 = vmatprep.subr.bf16.mxu0 0
    %752 = vmatpush1.bf16.msra.mxu0 %v538
    %753 = vmatprep.subr.bf16.mxu0 0
    %754 = vmatpush1.bf16.msra.mxu0 %v539
    %755 = vmatprep.subr.bf16.mxu0 0
    %756 = vmatpush1.bf16.msra.mxu0 %v540
    %757 = vmatprep.subr.bf16.mxu0 0
    %758 = vmatpush1.bf16.msra.mxu0 %v541
    %759 = vmatprep.subr.bf16.mxu0 0
    %760 = vmatpush1.bf16.msra.mxu0 %v542
    %761 = vmatprep.subr.bf16.mxu0 0
    %762 = vmatpush1.bf16.msra.mxu0 %v543
    %763 = vmatprep.mubr.bf16.mxu0 %v215
    %764 = vmatmul.mubr.bf16.gmra.mrb[0].mxu0 %v214
    %v765 = vpop.f32.mrb[0].mxu0
    %v766 = vadd.f32 %v725, %v765
    %v767 = vpop.f32.mrb[0].mxu0
    %v768 = vpop.f32.mrb[0].mxu0
    %v769 = vadd.f32 %v728, %v768
    %v770 = vpop.f32.mrb[0].mxu0
    %771 = vdwg.mxu0
    %v772 = vadd.f32 %v766, %v769
    %773 = vadd.xlane.f32.xlu0 %v772
    %v774 = vpop.xlane.xlu0 %773
    %v775 = vrot.slane %v774, 4
    %v776 = vadd.f32 %v774, %v775
    %v777 = vrot.slane %v776, 2
    %v778 = vadd.f32 %v776, %v777
    %v779 = vrot.slane %v778, 1
    %v780 = vadd.f32 %v778, %v779
    %s781 = vtos %v780
    %v782 = vstv %s781
    %v783 = vmul.f32 %v766, %v766
    %v784 = vmul.f32 %v769, %v769
    %v785 = vadd.f32 %v783, %v784
    %786 = vadd.xlane.f32.xlu0 %v785
    %v787 = vpop.xlane.xlu0 %786
    %v788 = vrot.slane %v787, 4
    %v789 = vadd.f32 %v787, %v788
    %v790 = vrot.slane %v789, 2
    %v791 = vadd.f32 %v789, %v790
    %v792 = vrot.slane %v791, 1
    %v793 = vadd.f32 %v791, %v792
    %s794 = vtos %v793
    %v795 = vstv %s794
    %v796 = vmul.f32 %v782, 0.00048828125
    %v797 = vmul.f32 %v795, 0.00048828125
    %v798 = vmul.f32 %v796, %v796
    %v799 = vsub.f32 %v797, %v798
    %v800 = vadd.f32 %v799, 1e-05
    %v801 = vrsqrt.pop %v800
    %v802 = vsub.f32 0.0, %v796
    %v803 = vmul.f32 %v802, %v801
    %v804 = vmul.f32 %v766, %v801
    %v805 = vmul.f32 %v769, %v801
    %v806 = vadd.f32 %v804, %v803
    %v807 = vadd.f32 %v805, %v803
    %v808 = vld [vmem:[%s3] sm:$0xff]
    %v809 = vld [vmem:[%s3 + $0x8] sm:$0xff]
    %v810 = vmul.f32 %v806, %v808
    %v811 = vmul.f32 %v807, %v809
    %v812 = vld [vmem:[%s4] sm:$0xff]
    %v813 = vld [vmem:[%s4 + $0x8] sm:$0xff]
    %v814 = vadd.f32 %v810, %v812
    %v815 = vadd.f32 %v811, %v813
    %v816 = vpack.c.bf16 %v815, %v814
    %v817 = vld [vmem:[%s5] sm:$0xf]
    %v818 = vld [vmem:[%s5 + $0x4] sm:$0xf]
    %v819 = vld [vmem:[%s5 + $0x8] sm:$0xf]
    %v820 = vld [vmem:[%s5 + $0xc] sm:$0xf]
    %v821 = vld [vmem:[%s5 + $0x10] sm:$0xf]
    %v822 = vld [vmem:[%s5 + $0x14] sm:$0xf]
    %v823 = vld [vmem:[%s5 + $0x18] sm:$0xf]
    %v824 = vld [vmem:[%s5 + $0x1c] sm:$0xf]
    %v825 = vld [vmem:[%s5 + $0x20] sm:$0xf]
    %v826 = vld [vmem:[%s5 + $0x24] sm:$0xf]
    %v827 = vld [vmem:[%s5 + $0x28] sm:$0xf]
    %v828 = vld [vmem:[%s5 + $0x2c] sm:$0xf]
    %v829 = vld [vmem:[%s5 + $0x30] sm:$0xf]
    %v830 = vld [vmem:[%s5 + $0x34] sm:$0xf]
    %v831 = vld [vmem:[%s5 + $0x38] sm:$0xf]
    %v832 = vld [vmem:[%s5 + $0x3c] sm:$0xf]
    %v833 = vld [vmem:[%s6] sm:$0x1]
    %v835 = vlaneseq
    %v836 = vshrl.u32 %v835, 7
    %v837 = vsub.s32 0, %v836
    %v838 = vrot.slane %v833, %v837
    %v856 = vunpack.c.l.b16 %v817
    %v857 = vunpack.c.l.b16 %v818
    %v858 = vunpack.c.l.b16 %v819
    %v859 = vunpack.c.l.b16 %v820
    %v860 = vunpack.c.l.b16 %v821
    %v861 = vunpack.c.l.b16 %v822
    %v862 = vunpack.c.l.b16 %v823
    %v863 = vunpack.c.l.b16 %v824
    %v864 = vunpack.c.l.b16 %v825
    %v865 = vunpack.c.l.b16 %v826
    %v866 = vunpack.c.l.b16 %v827
    %v867 = vunpack.c.l.b16 %v828
    %v868 = vunpack.c.l.b16 %v829
    %v869 = vunpack.c.l.b16 %v830
    %v870 = vunpack.c.l.b16 %v831
    %v871 = vunpack.c.l.b16 %v832
    %v872 = vpack.c.b16 %v857, %v856
    %v873 = vpack.c.b16 %v859, %v858
    %v874 = vpack.c.b16 %v861, %v860
    %v875 = vpack.c.b16 %v863, %v862
    %v876 = vpack.c.b16 %v865, %v864
    %v877 = vpack.c.b16 %v867, %v866
    %v878 = vpack.c.b16 %v869, %v868
    %v879 = vpack.c.b16 %v871, %v870
    %888 = vmatprep.subr.bf16.mxu0 0
    %889 = vmatpush1.bf16.msra.mxu0 %v872
    %890 = vmatprep.subr.bf16.mxu0 0
    %891 = vmatpush1.bf16.msra.mxu0 %v873
    %892 = vmatprep.subr.bf16.mxu0 0
    %893 = vmatpush1.bf16.msra.mxu0 %v874
    %894 = vmatprep.subr.bf16.mxu0 0
    %895 = vmatpush1.bf16.msra.mxu0 %v875
    %896 = vmatprep.subr.bf16.mxu0 0
    %897 = vmatpush1.bf16.msra.mxu0 %v876
    %898 = vmatprep.subr.bf16.mxu0 0
    %899 = vmatpush1.bf16.msra.mxu0 %v877
    %900 = vmatprep.subr.bf16.mxu0 0
    %901 = vmatpush1.bf16.msra.mxu0 %v878
    %902 = vmatprep.subr.bf16.mxu0 0
    %903 = vmatpush1.bf16.msra.mxu0 %v879
    %904 = vmatprep.subr.bf16.mxu0 0
    %905 = vmatpush1.bf16.msra.mxu0 0
    %906 = vmatprep.subr.bf16.mxu0 0
    %907 = vmatpush1.bf16.msra.mxu0 0
    %908 = vmatprep.subr.bf16.mxu0 0
    %909 = vmatpush1.bf16.msra.mxu0 0
    %910 = vmatprep.subr.bf16.mxu0 0
    %911 = vmatpush1.bf16.msra.mxu0 0
    %912 = vmatprep.subr.bf16.mxu0 0
    %913 = vmatpush1.bf16.msra.mxu0 0
    %914 = vmatprep.subr.bf16.mxu0 0
    %915 = vmatpush1.bf16.msra.mxu0 0
    %916 = vmatprep.subr.bf16.mxu0 0
    %917 = vmatpush1.bf16.msra.mxu0 0
    %918 = vmatprep.subr.bf16.mxu0 0
    %919 = vmatpush1.bf16.msra.mxu0 0
    %920 = vmatprep.mubr.bf16.mxu0 0
    %921 = vmatmul.mubr.bf16.gmra.mrb[0].mxu0 %v816
    %v922 = vpop.f32.mrb[0].mxu0
    %v923 = vadd.f32 %v838, %v922
    %v924 = vpop.f32.mrb[0].mxu0
    %v925 = vpop.f32.mrb[0].mxu0
    %v926 = vadd.f32 %v838, %v925
    %v927 = vpop.f32.mrb[0].mxu0
    %928 = vdwg.mxu0
    %v929 = vmul.f32 %v923, 0.5
    %v930 = vmul.f32 %v926, 0.5
    %v931 = vtanh.pop %v929
    %v932 = vtanh.pop %v930
    %v933 = vadd.f32 %v931, 1.0
    %v934 = vadd.f32 %v932, 1.0
    %v935 = vmul.f32 %v933, 0.5
    %v936 = vmul.f32 %v934, 0.5
    %937 = vst [vmem:[%s7] sm:$0xff] %v935
    %938 = vst [vmem:[%s7 + $0x8] sm:$0xff] %v936
    // Predicated region
    $region34: #{output_layer_forward.1} parent=1 // pred_check
      _
    $region35: #{output_layer_forward.1} parent=1 // pred_check_branch
      %940 = sbr.rel (0) target = $region37
    $region36: #{output_layer_forward.1} parent=1 // pred_region
      _
    $region37: #{output_layer_forward.1} parent=1 // pred_fallthru
      _
    // Predicated region
    $region38: #{output_layer_forward.1} parent=1 // pred_check
      _
    $region39: #{output_layer_forward.1} parent=1 // pred_check_branch
      %942 = sbr.rel (0) target = $region41
    $region40: #{output_layer_forward.1} parent=1 // pred_region
      _
    $region41: #{output_layer_forward.1} parent=1 // pred_fallthru
      _
    %943 = vsyncpa [#allocation3], 1

</llo_original>
